<compile_context>
chip_gen: v7x
topology: tpu7x:2x2x1
jax: 0.10.0
libtpu: 0.0.40
codegen_flags: <defaults>
</compile_context>

<pallas_src>
import functools

import numpy as np
import jax
import jax.numpy as jnp
from jax.experimental import pallas as pl
from jax.experimental.pallas import tpu as pltpu


def _leaky(x):
    return jnp.where(x > 0, x, 0.1 * x)


def _resblock_kernel(mask_ref, x_ref, w1_ref, b1_ref, w2_ref, b2_ref, o_ref,
                     *, H, W, CP):
    """One batch element per grid step.

    mask_ref: (9, H*W) f32 {0,1}   per-tap validity (zero 'same' padding)
    x_ref   : (CP, H*W) f32        image, channels padded to CP, spatial in lanes
    w*_ref  : (CP, 9*CP) bf16      im2col-reshaped conv weights (row=co, col=(kh,kw,ci))
    b*_ref  : (CP, 1)   f32        biases
    o_ref   : (CP, H*W)            output
    """
    HW = H * W
    x = x_ref[...]                       # (CP, HW) f32, stays resident for the residual
    masks = mask_ref[...]                # (9, HW) f32

    def im2col(inp):
        # inp: (CP, HW) f32  ->  (9*CP, HW) bf16 patch matrix.
        parts = []
        t = 0
        for dh in (-1, 0, 1):
            for dw in (-1, 0, 1):
                s = dh * W + dw          # flat source offset of this tap
                if s == 0:
                    part = inp           # centre tap: always valid, no mask needed
                else:
                    # shifted[:, i] = inp[:, i + s]; wrapped / out-of-image positions
                    # are zeroed by the tap mask (== zero padding of the conv).
                    part = pltpu.roll(inp, (-s) % HW, axis=1) * masks[t:t + 1, :]
                parts.append(part)
                t += 1
        # 8-row f32 pieces -> sublane-tile aligned concat, then one cast to bf16.
        return jnp.concatenate(parts, axis=0).astype(jnp.bfloat16)

    # conv1 + LeakyReLU  (single MXU matmul, f32 accumulate)
    y1 = _leaky(jnp.dot(w1_ref[...], im2col(x),
                        preferred_element_type=jnp.float32) + b1_ref[...])
    # conv2 + LeakyReLU
    y2 = _leaky(jnp.dot(w2_ref[...], im2col(y1),
                        preferred_element_type=jnp.float32) + b2_ref[...])
    # residual add + final LeakyReLU; lane-dense unmasked store.
    o_ref[...] = _leaky(x + y2).astype(o_ref.dtype)


def resblock_pallas(x_nchw, w1, b1, w2, b2):
    """x_nchw: (N, C, H, W) float32; w*: (3,3,Cin,Cout) HWIO; b*: (Cout,)."""
    N, C, H, W = x_nchw.shape
    Cout = w1.shape[-1]
    assert C == Cout, "residual add requires in_channels == out_channels (stride=1)"
    HW = H * W
    CP = ((C + 7) // 8) * 8              # pad channels to a sublane multiple

    # (N, C, H, W) -> (N, CP, H*W): spatial in lanes, zero-padded channels.
    x_flat = jnp.pad(x_nchw.reshape(N, C, HW), ((0, 0), (0, CP - C), (0, 0)))

    def prep_w(w):   # HWIO (3,3,Cin,Cout) -> (CP, 9*CP) bf16; col order = (kh, kw, ci)
        wp = jnp.pad(w, ((0, 0), (0, 0), (0, CP - C), (0, CP - Cout)))
        return jnp.transpose(wp, (3, 0, 1, 2)).reshape(CP, 9 * CP).astype(jnp.bfloat16)

    def prep_b(b):   # (Cout,) -> (CP, 1) f32
        return jnp.pad(b, (0, CP - Cout)).reshape(CP, 1).astype(jnp.float32)

    # 0/1 validity mask of each of the 9 taps (implements the zero 'same' padding).
    hh, ww = np.meshgrid(np.arange(H), np.arange(W), indexing="ij")
    masks = np.stack([((hh + dh >= 0) & (hh + dh < H) &
                       (ww + dw >= 0) & (ww + dw < W)).reshape(HW)
                      for dh in (-1, 0, 1) for dw in (-1, 0, 1)])
    masks = jnp.asarray(masks, dtype=jnp.float32)          # (9, HW)

    kernel = functools.partial(_resblock_kernel, H=H, W=W, CP=CP)

    out = pl.pallas_call(
        kernel,
        out_shape=jax.ShapeDtypeStruct((N, CP, HW), x_nchw.dtype),
        grid_spec=pltpu.PrefetchScalarGridSpec(
            num_scalar_prefetch=0,
            grid=(N,),
            in_specs=[
                pl.BlockSpec((9, HW), lambda n: (0, 0)),            # tap masks (resident)
                pl.BlockSpec((None, CP, HW), lambda n: (n, 0, 0)),  # x, one image / step
                pl.BlockSpec((CP, 9 * CP), lambda n: (0, 0)),       # W1 (im2col, bf16)
                pl.BlockSpec((CP, 1), lambda n: (0, 0)),            # b1
                pl.BlockSpec((CP, 9 * CP), lambda n: (0, 0)),       # W2 (im2col, bf16)
                pl.BlockSpec((CP, 1), lambda n: (0, 0)),            # b2
            ],
            out_specs=pl.BlockSpec((None, CP, HW), lambda n: (n, 0, 0)),
        ),
        compiler_params=pltpu.CompilerParams(
            dimension_semantics=("parallel",)),
    )(masks, x_flat, prep_w(w1), prep_b(b1), prep_w(w2), prep_b(b2))

    # drop channel padding, back to NCHW
    return out[:, :C, :].reshape(N, C, H, W)


def _reference(x_nchw, w1, b1, w2, b2):
    """Pure-JAX reference (lax conv, NCHW, f32) mirroring the PyTorch forward."""
    def conv_lrelu(x, w_hwio, b):
        w_oihw = jnp.transpose(w_hwio, (3, 2, 0, 1))
        y = jax.lax.conv_general_dilated(
            x, w_oihw, window_strides=(1, 1), padding=((1, 1), (1, 1)),
            dimension_numbers=("NCHW", "OIHW", "NCHW"))
        y = y + b.reshape(1, -1, 1, 1)
        return jnp.where(y > 0, y, 0.1 * y)

    y = conv_lrelu(conv_lrelu(x_nchw, w1, b1), w2, b2)
    z = x_nchw + y
    return jnp.where(z > 0, z, 0.1 * z)


if __name__ == "__main__":
    N, C, H, W = 2, 4, 16, 16          # in_channels = out_channels = 4, stride = 1
    key = jax.random.PRNGKey(0)
    kx, k1, k2, k3, k4 = jax.random.split(key, 5)

    x = jax.random.normal(kx, (N, C, H, W), dtype=jnp.float32)
    w1 = jax.random.normal(k1, (3, 3, C, C), dtype=jnp.float32) * 0.1
    b1 = jax.random.normal(k2, (C,), dtype=jnp.float32) * 0.1
    w2 = jax.random.normal(k3, (3, 3, C, C), dtype=jnp.float32) * 0.1
    b2 = jax.random.normal(k4, (C,), dtype=jnp.float32) * 0.1

    out = jax.block_until_ready(resblock_pallas(x, w1, b1, w2, b2))
    ref = jax.block_until_ready(_reference(x, w1, b1, w2, b2))

    assert out.shape == (N, C, H, W)
    # bf16 MXU operands (f32 accumulation) -> tolerance loosened vs the f32 reference.
    assert jnp.allclose(out, ref, atol=3e-2, rtol=3e-2)
    print("KERNEL_OK")
</pallas_src>

<mosaic_0001>
module attributes {stable_mosaic.version = 11 : i64} {
  func.func @_resblock_kernel(%arg0: i32, %arg1: memref<9x256xf32, #tpu.memory_space<vmem>>, %arg2: memref<1x8x256xf32, #tpu.memory_space<vmem>>, %arg3: memref<8x72xbf16, #tpu.memory_space<vmem>>, %arg4: memref<8x1xf32, #tpu.memory_space<vmem>>, %arg5: memref<8x72xbf16, #tpu.memory_space<vmem>>, %arg6: memref<8x1xf32, #tpu.memory_space<vmem>>, %arg7: memref<1x8x256xf32, #tpu.memory_space<vmem>>) attributes {dimension_semantics = [#tpu.dimension_semantics<parallel>], iteration_bounds = array<i64: 2>, scalar_prefetch = 0 : i64, scratch_operands = 0 : i64, tpu.core_type = #tpu.core_type<tc>, window_params = [{pipeline_mode = #tpu.pipeline_mode<synchronous>, transform_indices = @transform_0, window_bounds = array<i64: 9, 256>}, {transform_indices = @transform_1, window_bounds = array<i64: 1, 8, 256>}, {pipeline_mode = #tpu.pipeline_mode<synchronous>, transform_indices = @transform_2, window_bounds = array<i64: 8, 72>}, {pipeline_mode = #tpu.pipeline_mode<synchronous>, transform_indices = @transform_3, window_bounds = array<i64: 8, 1>}, {pipeline_mode = #tpu.pipeline_mode<synchronous>, transform_indices = @transform_4, window_bounds = array<i64: 8, 72>}, {pipeline_mode = #tpu.pipeline_mode<synchronous>, transform_indices = @transform_5, window_bounds = array<i64: 8, 1>}, {transform_indices = @transform_6, window_bounds = array<i64: 1, 8, 256>}]} {
    %c0 = arith.constant 0 : index
    %c0_0 = arith.constant 0 : index
    %c0_1 = arith.constant 0 : index
    %0 = vector.load %arg2[%c0, %c0_0, %c0_1] : memref<1x8x256xf32, #tpu.memory_space<vmem>>, vector<1x8x256xf32>
    %1 = vector.shape_cast %0 : vector<1x8x256xf32> to vector<8x256xf32>
    %c0_2 = arith.constant 0 : index
    %c0_3 = arith.constant 0 : index
    %2 = vector.load %arg1[%c0_2, %c0_3] : memref<9x256xf32, #tpu.memory_space<vmem>>, vector<9x256xf32>
    %c0_4 = arith.constant 0 : index
    %c0_5 = arith.constant 0 : index
    %3 = vector.load %arg3[%c0_4, %c0_5] : memref<8x72xbf16, #tpu.memory_space<vmem>>, vector<8x72xbf16>
    %c17_i32 = arith.constant 17 : i32
    %4 = tpu.dynamic_rotate %1 by %c17_i32 dim 1 : vector<8x256xf32>, i32 -> vector<8x256xf32>
    %5 = vector.extract_strided_slice %2 {offsets = [0, 0], sizes = [1, 256], strides = [1, 1]} : vector<9x256xf32> to vector<1x256xf32>
    %6 = vector.broadcast %5 : vector<1x256xf32> to vector<8x256xf32>
    %7 = arith.mulf %4, %6 : vector<8x256xf32>
    %c16_i32 = arith.constant 16 : i32
    %8 = tpu.dynamic_rotate %1 by %c16_i32 dim 1 : vector<8x256xf32>, i32 -> vector<8x256xf32>
    %9 = vector.extract_strided_slice %2 {offsets = [1, 0], sizes = [1, 256], strides = [1, 1]} : vector<9x256xf32> to vector<1x256xf32>
    %10 = vector.broadcast %9 : vector<1x256xf32> to vector<8x256xf32>
    %11 = arith.mulf %8, %10 : vector<8x256xf32>
    %c15_i32 = arith.constant 15 : i32
    %12 = tpu.dynamic_rotate %1 by %c15_i32 dim 1 : vector<8x256xf32>, i32 -> vector<8x256xf32>
    %13 = vector.extract_strided_slice %2 {offsets = [2, 0], sizes = [1, 256], strides = [1, 1]} : vector<9x256xf32> to vector<1x256xf32>
    %14 = vector.broadcast %13 : vector<1x256xf32> to vector<8x256xf32>
    %15 = arith.mulf %12, %14 : vector<8x256xf32>
    %c1_i32 = arith.constant 1 : i32
    %16 = tpu.dynamic_rotate %1 by %c1_i32 dim 1 : vector<8x256xf32>, i32 -> vector<8x256xf32>
    %17 = vector.extract_strided_slice %2 {offsets = [3, 0], sizes = [1, 256], strides = [1, 1]} : vector<9x256xf32> to vector<1x256xf32>
    %18 = vector.broadcast %17 : vector<1x256xf32> to vector<8x256xf32>
    %19 = arith.mulf %16, %18 : vector<8x256xf32>
    %c255_i32 = arith.constant 255 : i32
    %20 = tpu.dynamic_rotate %1 by %c255_i32 dim 1 : vector<8x256xf32>, i32 -> vector<8x256xf32>
    %21 = vector.extract_strided_slice %2 {offsets = [5, 0], sizes = [1, 256], strides = [1, 1]} : vector<9x256xf32> to vector<1x256xf32>
    %22 = vector.broadcast %21 : vector<1x256xf32> to vector<8x256xf32>
    %23 = arith.mulf %20, %22 : vector<8x256xf32>
    %c241_i32 = arith.constant 241 : i32
    %24 = tpu.dynamic_rotate %1 by %c241_i32 dim 1 : vector<8x256xf32>, i32 -> vector<8x256xf32>
    %25 = vector.extract_strided_slice %2 {offsets = [6, 0], sizes = [1, 256], strides = [1, 1]} : vector<9x256xf32> to vector<1x256xf32>
    %26 = vector.broadcast %25 : vector<1x256xf32> to vector<8x256xf32>
    %27 = arith.mulf %24, %26 : vector<8x256xf32>
    %c240_i32 = arith.constant 240 : i32
    %28 = tpu.dynamic_rotate %1 by %c240_i32 dim 1 : vector<8x256xf32>, i32 -> vector<8x256xf32>
    %29 = vector.extract_strided_slice %2 {offsets = [7, 0], sizes = [1, 256], strides = [1, 1]} : vector<9x256xf32> to vector<1x256xf32>
    %30 = vector.broadcast %29 : vector<1x256xf32> to vector<8x256xf32>
    %31 = arith.mulf %28, %30 : vector<8x256xf32>
    %c239_i32 = arith.constant 239 : i32
    %32 = tpu.dynamic_rotate %1 by %c239_i32 dim 1 : vector<8x256xf32>, i32 -> vector<8x256xf32>
    %33 = vector.extract_strided_slice %2 {offsets = [8, 0], sizes = [1, 256], strides = [1, 1]} : vector<9x256xf32> to vector<1x256xf32>
    %34 = vector.broadcast %33 : vector<1x256xf32> to vector<8x256xf32>
    %35 = arith.mulf %32, %34 : vector<8x256xf32>
    %36 = tpu.concatenate %7, %11, %15, %19, %1, %23, %27, %31, %35 in 0 : vector<8x256xf32>, vector<8x256xf32>, vector<8x256xf32>, vector<8x256xf32>, vector<8x256xf32>, vector<8x256xf32>, vector<8x256xf32>, vector<8x256xf32>, vector<8x256xf32> -> vector<72x256xf32>
    %37 = arith.truncf %36 : vector<72x256xf32> to vector<72x256xbf16>
    %cst = arith.constant dense<0.000000e+00> : vector<8x256xf32>
    %38 = tpu.matmul %3, %37, %cst {dimension_numbers = #tpu.dot_dimension_numbers<[1], [0], [0], [1], [0, 0, 1, 1], [], []>} : vector<8x72xbf16>, vector<72x256xbf16>, vector<8x256xf32> -> vector<8x256xf32>
    %c0_6 = arith.constant 0 : index
    %c0_7 = arith.constant 0 : index
    %39 = vector.load %arg4[%c0_6, %c0_7] : memref<8x1xf32, #tpu.memory_space<vmem>>, vector<8x1xf32>
    %40 = vector.broadcast %39 : vector<8x1xf32> to vector<8x256xf32>
    %41 = arith.addf %38, %40 : vector<8x256xf32>
    %cst_8 = arith.constant 0.000000e+00 : f32
    %42 = vector.broadcast %cst_8 : f32 to vector<8x256xf32>
    %43 = arith.cmpf ogt, %41, %42 : vector<8x256xf32>
    %cst_9 = arith.constant 1.000000e-01 : f32
    %44 = vector.broadcast %cst_9 : f32 to vector<8x256xf32>
    %45 = arith.mulf %44, %41 : vector<8x256xf32>
    %46 = arith.select %43, %41, %45 : vector<8x256xi1>, vector<8x256xf32>
    %c0_10 = arith.constant 0 : index
    %c0_11 = arith.constant 0 : index
    %47 = vector.load %arg5[%c0_10, %c0_11] : memref<8x72xbf16, #tpu.memory_space<vmem>>, vector<8x72xbf16>
    %c17_i32_12 = arith.constant 17 : i32
    %48 = tpu.dynamic_rotate %46 by %c17_i32_12 dim 1 : vector<8x256xf32>, i32 -> vector<8x256xf32>
    %49 = vector.extract_strided_slice %2 {offsets = [0, 0], sizes = [1, 256], strides = [1, 1]} : vector<9x256xf32> to vector<1x256xf32>
    %50 = vector.broadcast %49 : vector<1x256xf32> to vector<8x256xf32>
    %51 = arith.mulf %48, %50 : vector<8x256xf32>
    %c16_i32_13 = arith.constant 16 : i32
    %52 = tpu.dynamic_rotate %46 by %c16_i32_13 dim 1 : vector<8x256xf32>, i32 -> vector<8x256xf32>
    %53 = vector.extract_strided_slice %2 {offsets = [1, 0], sizes = [1, 256], strides = [1, 1]} : vector<9x256xf32> to vector<1x256xf32>
    %54 = vector.broadcast %53 : vector<1x256xf32> to vector<8x256xf32>
    %55 = arith.mulf %52, %54 : vector<8x256xf32>
    %c15_i32_14 = arith.constant 15 : i32
    %56 = tpu.dynamic_rotate %46 by %c15_i32_14 dim 1 : vector<8x256xf32>, i32 -> vector<8x256xf32>
    %57 = vector.extract_strided_slice %2 {offsets = [2, 0], sizes = [1, 256], strides = [1, 1]} : vector<9x256xf32> to vector<1x256xf32>
    %58 = vector.broadcast %57 : vector<1x256xf32> to vector<8x256xf32>
    %59 = arith.mulf %56, %58 : vector<8x256xf32>
    %c1_i32_15 = arith.constant 1 : i32
    %60 = tpu.dynamic_rotate %46 by %c1_i32_15 dim 1 : vector<8x256xf32>, i32 -> vector<8x256xf32>
    %61 = vector.extract_strided_slice %2 {offsets = [3, 0], sizes = [1, 256], strides = [1, 1]} : vector<9x256xf32> to vector<1x256xf32>
    %62 = vector.broadcast %61 : vector<1x256xf32> to vector<8x256xf32>
    %63 = arith.mulf %60, %62 : vector<8x256xf32>
    %c255_i32_16 = arith.constant 255 : i32
    %64 = tpu.dynamic_rotate %46 by %c255_i32_16 dim 1 : vector<8x256xf32>, i32 -> vector<8x256xf32>
    %65 = vector.extract_strided_slice %2 {offsets = [5, 0], sizes = [1, 256], strides = [1, 1]} : vector<9x256xf32> to vector<1x256xf32>
    %66 = vector.broadcast %65 : vector<1x256xf32> to vector<8x256xf32>
    %67 = arith.mulf %64, %66 : vector<8x256xf32>
    %c241_i32_17 = arith.constant 241 : i32
    %68 = tpu.dynamic_rotate %46 by %c241_i32_17 dim 1 : vector<8x256xf32>, i32 -> vector<8x256xf32>
    %69 = vector.extract_strided_slice %2 {offsets = [6, 0], sizes = [1, 256], strides = [1, 1]} : vector<9x256xf32> to vector<1x256xf32>
    %70 = vector.broadcast %69 : vector<1x256xf32> to vector<8x256xf32>
    %71 = arith.mulf %68, %70 : vector<8x256xf32>
    %c240_i32_18 = arith.constant 240 : i32
    %72 = tpu.dynamic_rotate %46 by %c240_i32_18 dim 1 : vector<8x256xf32>, i32 -> vector<8x256xf32>
    %73 = vector.extract_strided_slice %2 {offsets = [7, 0], sizes = [1, 256], strides = [1, 1]} : vector<9x256xf32> to vector<1x256xf32>
    %74 = vector.broadcast %73 : vector<1x256xf32> to vector<8x256xf32>
    %75 = arith.mulf %72, %74 : vector<8x256xf32>
    %c239_i32_19 = arith.constant 239 : i32
    %76 = tpu.dynamic_rotate %46 by %c239_i32_19 dim 1 : vector<8x256xf32>, i32 -> vector<8x256xf32>
    %77 = vector.extract_strided_slice %2 {offsets = [8, 0], sizes = [1, 256], strides = [1, 1]} : vector<9x256xf32> to vector<1x256xf32>
    %78 = vector.broadcast %77 : vector<1x256xf32> to vector<8x256xf32>
    %79 = arith.mulf %76, %78 : vector<8x256xf32>
    %80 = tpu.concatenate %51, %55, %59, %63, %46, %67, %71, %75, %79 in 0 : vector<8x256xf32>, vector<8x256xf32>, vector<8x256xf32>, vector<8x256xf32>, vector<8x256xf32>, vector<8x256xf32>, vector<8x256xf32>, vector<8x256xf32>, vector<8x256xf32> -> vector<72x256xf32>
    %81 = arith.truncf %80 : vector<72x256xf32> to vector<72x256xbf16>
    %cst_20 = arith.constant dense<0.000000e+00> : vector<8x256xf32>
    %82 = tpu.matmul %47, %81, %cst_20 {dimension_numbers = #tpu.dot_dimension_numbers<[1], [0], [0], [1], [0, 0, 1, 1], [], []>} : vector<8x72xbf16>, vector<72x256xbf16>, vector<8x256xf32> -> vector<8x256xf32>
    %c0_21 = arith.constant 0 : index
    %c0_22 = arith.constant 0 : index
    %83 = vector.load %arg6[%c0_21, %c0_22] : memref<8x1xf32, #tpu.memory_space<vmem>>, vector<8x1xf32>
    %84 = vector.broadcast %83 : vector<8x1xf32> to vector<8x256xf32>
    %85 = arith.addf %82, %84 : vector<8x256xf32>
    %cst_23 = arith.constant 0.000000e+00 : f32
    %86 = vector.broadcast %cst_23 : f32 to vector<8x256xf32>
    %87 = arith.cmpf ogt, %85, %86 : vector<8x256xf32>
    %cst_24 = arith.constant 1.000000e-01 : f32
    %88 = vector.broadcast %cst_24 : f32 to vector<8x256xf32>
    %89 = arith.mulf %88, %85 : vector<8x256xf32>
    %90 = arith.select %87, %85, %89 : vector<8x256xi1>, vector<8x256xf32>
    %91 = arith.addf %1, %90 : vector<8x256xf32>
    %cst_25 = arith.constant 0.000000e+00 : f32
    %92 = vector.broadcast %cst_25 : f32 to vector<8x256xf32>
    %93 = arith.cmpf ogt, %91, %92 : vector<8x256xf32>
    %cst_26 = arith.constant 1.000000e-01 : f32
    %94 = vector.broadcast %cst_26 : f32 to vector<8x256xf32>
    %95 = arith.mulf %94, %91 : vector<8x256xf32>
    %96 = arith.select %93, %91, %95 : vector<8x256xi1>, vector<8x256xf32>
    %c0_27 = arith.constant 0 : index
    %c0_28 = arith.constant 0 : index
    %c0_29 = arith.constant 0 : index
    %97 = vector.load %arg7[%c0_27, %c0_28, %c0_29] : memref<1x8x256xf32, #tpu.memory_space<vmem>>, vector<1x8x256xf32>
    %98 = vector.shape_cast %97 : vector<1x8x256xf32> to vector<8x256xf32>
    %99 = vector.shape_cast %96 : vector<8x256xf32> to vector<1x8x256xf32>
    tpu.vector_store %arg7[%c0_27, %c0_28, %c0_29], %99 {strides = array<i32>} : memref<1x8x256xf32, #tpu.memory_space<vmem>>, vector<1x8x256xf32>,
    return
  }
  func.func @transform_0(%arg0: i32) -> (i32, i32) {
    %c0_i32 = arith.constant 0 : i32
    %c0_i32_0 = arith.constant 0 : i32
    %c0_i32_1 = arith.constant 0 : i32
    return %c0_i32, %c0_i32_0 : i32, i32
  }
  func.func @transform_1(%arg0: i32) -> (i32, i32, i32) {
    %c0_i32 = arith.constant 0 : i32
    %c0_i32_0 = arith.constant 0 : i32
    %c0_i32_1 = arith.constant 0 : i32
    return %arg0, %c0_i32, %c0_i32_0 : i32, i32, i32
  }
  func.func @transform_2(%arg0: i32) -> (i32, i32) {
    %c0_i32 = arith.constant 0 : i32
    %c0_i32_0 = arith.constant 0 : i32
    %c0_i32_1 = arith.constant 0 : i32
    return %c0_i32, %c0_i32_0 : i32, i32
  }
  func.func @transform_3(%arg0: i32) -> (i32, i32) {
    %c0_i32 = arith.constant 0 : i32
    %c0_i32_0 = arith.constant 0 : i32
    %c0_i32_1 = arith.constant 0 : i32
    return %c0_i32, %c0_i32_0 : i32, i32
  }
  func.func @transform_4(%arg0: i32) -> (i32, i32) {
    %c0_i32 = arith.constant 0 : i32
    %c0_i32_0 = arith.constant 0 : i32
    %c0_i32_1 = arith.constant 0 : i32
    return %c0_i32, %c0_i32_0 : i32, i32
  }
  func.func @transform_5(%arg0: i32) -> (i32, i32) {
    %c0_i32 = arith.constant 0 : i32
    %c0_i32_0 = arith.constant 0 : i32
    %c0_i32_1 = arith.constant 0 : i32
    return %c0_i32, %c0_i32_0 : i32, i32
  }
  func.func @transform_6(%arg0: i32) -> (i32, i32, i32) {
    %c0_i32 = arith.constant 0 : i32
    %c0_i32_0 = arith.constant 0 : i32
    %c0_i32_1 = arith.constant 0 : i32
    return %arg0, %c0_i32, %c0_i32_0 : i32, i32, i32
  }
}

</mosaic_0001>

<llo_original>
// kernel: tpu_custom_call.1
$region0: #{tpu_custom_call.1}
  #allocation0 [shape = 'u32[]', space=smem, size = 0x4, offset = 0x4, fixed_abs, tag = 'smem constant byte address 0x4 - core index']
  #allocation1 [shape = 'u32[144,128]{1,0:T(1,128)}', space=vmem, size = 0x12000, scoped, tag = 'internal scratch']
  %s0 = inlined_call_operand.hbm [shape: f32[9,256], index: 0, kind: input, shape index: {}]
  %s1 = inlined_call_operand.hbm [shape: f32[2,8,256], index: 1, kind: input, shape index: {}]
  %s2 = inlined_call_operand.vmem [shape: bf16[8,72], index: 2, kind: input, shape index: {}]
  %s3 = inlined_call_operand.vmem [shape: f32[8,1], index: 3, kind: input, shape index: {}]
  %s4 = inlined_call_operand.vmem [shape: bf16[8,72], index: 4, kind: input, shape index: {}]
  %s5 = inlined_call_operand.vmem [shape: f32[8,1], index: 5, kind: input, shape index: {}]
  %s6 = inlined_call_operand.hbm [shape: f32[2,8,256], index: 6, kind: output, shape index: {}]
  %s7 = sld [smem:[#allocation0]]
  $region65: #{tpu_custom_call.1} parent=0
    _
  %s9 = ssub.s32 1, %s7
  %s10 = scalar_select 0, %s9, %s7
  $region1: #{tpu_custom_call.1} parent=0
    #allocation2 [shape = 'u8[16384]{0}', space=vmem, size = 0x4000, scoped, tag = 'input window, operand 0, single buffered']
    #allocation3 [shape = 's32[2]{0}', space=sflag, size = 0x8, scoped, tag = 'scoped memory for tpu_custom_call.1']
    #allocation4 [shape = 's32[2]{0}', space=sflag, size = 0x8, scoped, tag = 'scoped memory for tpu_custom_call.1']
    #allocation5 [shape = 'u8[16384]{0}', space=vmem, size = 0x4000, scoped, tag = 'input window, operand 1']
    #allocation6 [shape = 's32[2]{0}', space=sflag, size = 0x8, scoped, tag = 'scoped memory for tpu_custom_call.1']
    #allocation7 [shape = 'u8[16384]{0}', space=vmem, size = 0x4000, scoped, tag = 'output window, operand 0']
    %11 = vsyncpa [#allocation3], 0
    %12 = vsyncpa [#allocation6], 0
    %s13 = scalar_lea.sflag [#allocation6], 1
    %14 = vsyncpa %s13, 0
    %15 = vsyncpa [#allocation4], 0
    %s16 = scalar_lea.sflag [#allocation4], 1
    %17 = vsyncpa %s16, 0
    loop: start=0, step=1, limit=4
    $region2: #{tpu_custom_call.1} parent=1 // loop_pre_header
      _
    $region3: #{tpu_custom_call.1} parent=1 // loop_header
      %s19 = sphi 0, %s23
      %p20 = scmp.ge.s32.totalorder %s19, 4
      %s27 = sphi 0, %s27
      %s29 = sphi 0, %s27
      %s30 = sphi 0, %s29
      %s44 = sphi 0, %s30
      %s50 = sphi 0, %s52
      %s53 = sphi 0, %s50
      %s54 = sphi 0, %s53
      %s70 = sphi 0, %s54
      %s74 = sphi 0, %s74
      %s76 = sphi 0, %s74
      %s77 = sphi 0, %s76
      %s91 = sphi 0, %s77
      %s95 = sphi 0, %s95
      %s97 = sphi 0, %s95
      %s98 = sphi 0, %s97
      %s112 = sphi 0, %s98
      %s116 = sphi 0, %s116
      %s118 = sphi 0, %s116
      %s119 = sphi 0, %s118
      %s133 = sphi 0, %s119
      %s137 = sphi 0, %s137
      %s139 = sphi 0, %s137
      %s140 = sphi 0, %s139
      %s154 = sphi 0, %s140
      %s160 = sphi 0, %s162
      %s163 = sphi 0, %s160
      %s164 = sphi 0, %s163
      %s180 = sphi 0, %s164
    $region4: #{tpu_custom_call.1} parent=1 // loop_header_branch
      %22 = sbr.rel (%p20) target = $region8
    $region5: #{tpu_custom_call.1} parent=1 // loop_body
      %s24 = ssub.s32 %s19, 1
      %s25 = ssub.s32 %s19, 2
      %s26 = sadd.s32 %s19, 1
      %s28 = sadd.s32 %s27, 1
      %p31 = scmp.eq.s32.totalorder %s19, 1
      %p32 = scmp.ne.s32.totalorder %s27, %s29
      %p33 = scmp.eq.s32.totalorder %s19, 0
      %p34 = por %p32, %p33
      %p35 = scmp.ne.s32.totalorder %s27, %s29
      %p36 = scmp.eq.s32.totalorder %s24, 1
      %p37 = por %p35, %p36
      %p38 = scmp.ne.s32.totalorder %s29, %s30
      %p39 = scmp.eq.s32.totalorder %s24, 0
      %p40 = por %p38, %p39
      %p41 = scmp.ne.s32.totalorder %s29, %s30
      %p42 = scmp.eq.s32.totalorder %s25, 1
      %p43 = por %p41, %p42
      %p45 = scmp.ne.s32.totalorder %s30, %s44
      %p46 = scmp.eq.s32.totalorder %s25, 0
      %p47 = por %p45, %p46
      %s48 = ssub.s32 %s19, %s26
      %p49 = scmp.eq.s32.totalorder %s48, 0
      %s51 = sadd.s32 %s50, 1
      %s52 = scalar_select %p49, %s50, %s51
      %p55 = pneg %p49
      %p56 = scmp.eq.s32.totalorder %s19, 1
      %p57 = por %p55, %p56
      %p58 = scmp.ne.s32.totalorder %s50, %s53
      %p59 = scmp.eq.s32.totalorder %s19, 0
      %p60 = por %p58, %p59
      %p61 = scmp.ne.s32.totalorder %s50, %s53
      %p62 = scmp.eq.s32.totalorder %s24, 1
      %p63 = por %p61, %p62
      %p64 = scmp.ne.s32.totalorder %s53, %s54
      %p65 = scmp.eq.s32.totalorder %s24, 0
      %p66 = por %p64, %p65
      %p67 = scmp.ne.s32.totalorder %s53, %s54
      %p68 = scmp.eq.s32.totalorder %s25, 1
      %p69 = por %p67, %p68
      %p71 = scmp.ne.s32.totalorder %s54, %s70
      %p72 = scmp.eq.s32.totalorder %s25, 0
      %p73 = por %p71, %p72
      %s75 = sadd.s32 %s74, 1
      %p78 = scmp.eq.s32.totalorder %s19, 1
      %p79 = scmp.ne.s32.totalorder %s74, %s76
      %p80 = scmp.eq.s32.totalorder %s19, 0
      %p81 = por %p79, %p80
      %p82 = scmp.ne.s32.totalorder %s74, %s76
      %p83 = scmp.eq.s32.totalorder %s24, 1
      %p84 = por %p82, %p83
      %p85 = scmp.ne.s32.totalorder %s76, %s77
      %p86 = scmp.eq.s32.totalorder %s24, 0
      %p87 = por %p85, %p86
      %p88 = scmp.ne.s32.totalorder %s76, %s77
      %p89 = scmp.eq.s32.totalorder %s25, 1
      %p90 = por %p88, %p89
      %p92 = scmp.ne.s32.totalorder %s77, %s91
      %p93 = scmp.eq.s32.totalorder %s25, 0
      %p94 = por %p92, %p93
      %s96 = sadd.s32 %s95, 1
      %p99 = scmp.eq.s32.totalorder %s19, 1
      %p100 = scmp.ne.s32.totalorder %s95, %s97
      %p101 = scmp.eq.s32.totalorder %s19, 0
      %p102 = por %p100, %p101
      %p103 = scmp.ne.s32.totalorder %s95, %s97
      %p104 = scmp.eq.s32.totalorder %s24, 1
      %p105 = por %p103, %p104
      %p106 = scmp.ne.s32.totalorder %s97, %s98
      %p107 = scmp.eq.s32.totalorder %s24, 0
      %p108 = por %p106, %p107
      %p109 = scmp.ne.s32.totalorder %s97, %s98
      %p110 = scmp.eq.s32.totalorder %s25, 1
      %p111 = por %p109, %p110
      %p113 = scmp.ne.s32.totalorder %s98, %s112
      %p114 = scmp.eq.s32.totalorder %s25, 0
      %p115 = por %p113, %p114
      %s117 = sadd.s32 %s116, 1
      %p120 = scmp.eq.s32.totalorder %s19, 1
      %p121 = scmp.ne.s32.totalorder %s116, %s118
      %p122 = scmp.eq.s32.totalorder %s19, 0
      %p123 = por %p121, %p122
      %p124 = scmp.ne.s32.totalorder %s116, %s118
      %p125 = scmp.eq.s32.totalorder %s24, 1
      %p126 = por %p124, %p125
      %p127 = scmp.ne.s32.totalorder %s118, %s119
      %p128 = scmp.eq.s32.totalorder %s24, 0
      %p129 = por %p127, %p128
      %p130 = scmp.ne.s32.totalorder %s118, %s119
      %p131 = scmp.eq.s32.totalorder %s25, 1
      %p132 = por %p130, %p131
      %p134 = scmp.ne.s32.totalorder %s119, %s133
      %p135 = scmp.eq.s32.totalorder %s25, 0
      %p136 = por %p134, %p135
      %s138 = sadd.s32 %s137, 1
      %p141 = scmp.eq.s32.totalorder %s19, 1
      %p142 = scmp.ne.s32.totalorder %s137, %s139
      %p143 = scmp.eq.s32.totalorder %s19, 0
      %p144 = por %p142, %p143
      %p145 = scmp.ne.s32.totalorder %s137, %s139
      %p146 = scmp.eq.s32.totalorder %s24, 1
      %p147 = por %p145, %p146
      %p148 = scmp.ne.s32.totalorder %s139, %s140
      %p149 = scmp.eq.s32.totalorder %s24, 0
      %p150 = por %p148, %p149
      %p151 = scmp.ne.s32.totalorder %s139, %s140
      %p152 = scmp.eq.s32.totalorder %s25, 1
      %p153 = por %p151, %p152
      %p155 = scmp.ne.s32.totalorder %s140, %s154
      %p156 = scmp.eq.s32.totalorder %s25, 0
      %p157 = por %p155, %p156
      %s158 = ssub.s32 %s19, %s26
      %p159 = scmp.eq.s32.totalorder %s158, 0
      %s161 = sadd.s32 %s160, 1
      %s162 = scalar_select %p159, %s160, %s161
      %p165 = pneg %p159
      %p166 = scmp.eq.s32.totalorder %s19, 1
      %p167 = por %p165, %p166
      %p168 = scmp.ne.s32.totalorder %s160, %s163
      %p169 = scmp.eq.s32.totalorder %s19, 0
      %p170 = por %p168, %p169
      %p171 = scmp.ne.s32.totalorder %s160, %s163
      %p172 = scmp.eq.s32.totalorder %s24, 1
      %p173 = por %p171, %p172
      %p174 = scmp.ne.s32.totalorder %s163, %s164
      %p175 = scmp.eq.s32.totalorder %s24, 0
      %p176 = por %p174, %p175
      %p177 = scmp.ne.s32.totalorder %s163, %s164
      %p178 = scmp.eq.s32.totalorder %s25, 1
      %p179 = por %p177, %p178
      %p181 = scmp.ne.s32.totalorder %s164, %s180
      %p182 = scmp.eq.s32.totalorder %s25, 0
      %p183 = por %p181, %p182
      %p184 = scmp.le.s32.totalorder 1, %s19
      %p185 = scmp.lt.s32.totalorder %s19, 3
      %p186 = pnand %p184, %p185
      %p187 = pneg %p186
      // Predicated region
      $region9: #{tpu_custom_call.1} parent=5 // pred_check
        _
      $region10: #{tpu_custom_call.1} parent=5 // pred_check_branch
        %189 = sbr.rel (%p186) target = $region12
      $region11: #{tpu_custom_call.1} parent=5 // pred_region
        %s190 = ssub.s32 %s19, 1
        // Predicated region
        $region13: #{tpu_custom_call.1} parent=11 // pred_check
          %p191 = pneg %p40
        $region14: #{tpu_custom_call.1} parent=11 // pred_check_branch
          %193 = sbr.rel (%p191) target = $region16
        $region15: #{tpu_custom_call.1} parent=11 // pred_region
          %s195 = ssub.s32 512, 512
          %196 = vsyncadd [#allocation3], %s195
          %s197 = sshll.u32 [#allocation2], 4
          %s198 = int_to_ptr.vmem [resolvable:$true] %s197
          %203 = dma.hbm_to_vmem [thread:$0]  %s0, 512, %s198, [#allocation3], 256, 256, 16
        $region16: #{tpu_custom_call.1} parent=11 // pred_fallthru
          _
        // Predicated region
        $region17: #{tpu_custom_call.1} parent=11 // pred_check
          %p204 = pneg %p87
        $region18: #{tpu_custom_call.1} parent=11 // pred_check_branch
          %206 = sbr.rel (%p204) target = $region20
        $region19: #{tpu_custom_call.1} parent=11 // pred_region
          _
        $region20: #{tpu_custom_call.1} parent=11 // pred_fallthru
          _
        // Predicated region
        $region21: #{tpu_custom_call.1} parent=11 // pred_check
          %p207 = pneg %p108
        $region22: #{tpu_custom_call.1} parent=11 // pred_check_branch
          %209 = sbr.rel (%p207) target = $region24
        $region23: #{tpu_custom_call.1} parent=11 // pred_region
          _
        $region24: #{tpu_custom_call.1} parent=11 // pred_fallthru
          _
        // Predicated region
        $region25: #{tpu_custom_call.1} parent=11 // pred_check
          %p210 = pneg %p129
        $region26: #{tpu_custom_call.1} parent=11 // pred_check_branch
          %212 = sbr.rel (%p210) target = $region28
        $region27: #{tpu_custom_call.1} parent=11 // pred_region
          _
        $region28: #{tpu_custom_call.1} parent=11 // pred_fallthru
          _
        // Predicated region
        $region29: #{tpu_custom_call.1} parent=11 // pred_check
          %p213 = pneg %p150
        $region30: #{tpu_custom_call.1} parent=11 // pred_check_branch
          %215 = sbr.rel (%p213) target = $region32
        $region31: #{tpu_custom_call.1} parent=11 // pred_region
          _
        $region32: #{tpu_custom_call.1} parent=11 // pred_fallthru
          _
      $region12: #{tpu_custom_call.1} parent=5 // pred_fallthru
        _
      %p216 = scmp.lt.s32.totalorder %s19, 2
      // Predicated region
      $region33: #{tpu_custom_call.1} parent=5 // pred_check
        %p217 = pneg %p216
      $region34: #{tpu_custom_call.1} parent=5 // pred_check_branch
        %219 = sbr.rel (%p217) target = $region36
      $region35: #{tpu_custom_call.1} parent=5 // pred_region
        // Predicated region
        $region37: #{tpu_custom_call.1} parent=35 // pred_check
          %p220 = pneg %p60
        $region38: #{tpu_custom_call.1} parent=35 // pred_check_branch
          %222 = sbr.rel (%p220) target = $region40
        $region39: #{tpu_custom_call.1} parent=35 // pred_region
          %s223 = sand.u32 %s50, 1
          %s224 = scalar_lea.sflag [#allocation6], %s223
          %s225 = sand.u32 %s50, 1
          %s226 = smul.addr %s225, 16
          %s227 = scalar_lea.vmem [#allocation5], %s226
          %s229 = ssub.s32 256, 256
          %230 = vsyncadd %s224, %s229
          %s231 = smul.addr %s19, 2
          %s232 = smul.addr %s231, 128
          %s233 = scalar_lea.hbm %s1, %s232
          %s235 = sshll.u32 %s227, 4
          %s236 = int_to_ptr.vmem [resolvable:$true] %s235
          %238 = dma.hbm_to_vmem [thread:$0]  %s233, 256, %s236, %s224
        $region40: #{tpu_custom_call.1} parent=35 // pred_fallthru
          _
      $region36: #{tpu_custom_call.1} parent=5 // pred_fallthru
        _
      %p239 = scmp.le.s32.totalorder 1, %s19
      %p240 = scmp.lt.s32.totalorder %s19, 3
      %p241 = pnand %p239, %p240
      %p242 = pneg %p241
      // Predicated region
      $region41: #{tpu_custom_call.1} parent=5 // pred_check
        _
      $region42: #{tpu_custom_call.1} parent=5 // pred_check_branch
        %244 = sbr.rel (%p241) target = $region44
      $region43: #{tpu_custom_call.1} parent=5 // pred_region
        %s245 = ssub.s32 %s19, 1
        // Predicated region
        $region45: #{tpu_custom_call.1} parent=43 // pred_check
          %p246 = pneg %p40
        $region46: #{tpu_custom_call.1} parent=43 // pred_check_branch
          %248 = sbr.rel (%p246) target = $region48
        $region47: #{tpu_custom_call.1} parent=43 // pred_region
          %249 = dma.done [#allocation3], 512
        $region48: #{tpu_custom_call.1} parent=43 // pred_fallthru
          _
        %s250 = sand.u32 %s53, 1
        %s251 = scalar_lea.sflag [#allocation6], %s250
        %s252 = sand.u32 %s53, 1
        %s253 = smul.addr %s252, 16
        %s254 = scalar_lea.vmem [#allocation5], %s253
        // Predicated region
        $region49: #{tpu_custom_call.1} parent=43 // pred_check
          %p255 = pneg %p66
        $region50: #{tpu_custom_call.1} parent=43 // pred_check_branch
          %257 = sbr.rel (%p255) target = $region52
        $region51: #{tpu_custom_call.1} parent=43 // pred_region
          %258 = dma.done %s251, 256
        $region52: #{tpu_custom_call.1} parent=43 // pred_fallthru
          _
        %p259 = pneg %p40
        %p260 = pneg %p37
        %s261 = sand.u32 %s53, 1
        %s262 = scalar_lea.sflag [#allocation6], %s261
        %s263 = sand.u32 %s53, 1
        %s264 = smul.addr %s263, 16
        %s265 = scalar_lea.vmem [#allocation5], %s264
        %p266 = pneg %p66
        %p267 = pneg %p63
        %p268 = pneg %p87
        %p269 = pneg %p84
        %p270 = pneg %p108
        %p271 = pneg %p105
        %p272 = pneg %p129
        %p273 = pneg %p126
        %p274 = pneg %p150
        %p275 = pneg %p147
        %p276 = pneg %p176
        %p277 = pneg %p173
        %s278 = sand.u32 %s163, 1
        %s279 = scalar_lea.sflag [#allocation4], %s278
        %s280 = sand.u32 %s163, 1
        %s281 = smul.addr %s280, 16
        %s282 = scalar_lea.vmem [#allocation7], %s281
        %v284 = vld [vmem:[%s254] sm:$0xff]
        %v285 = vld [vmem:[%s254 + $0x8] sm:$0xff]
        %v286 = vld [vmem:[#allocation2] sm:$0xff]
        %v287 = vld [vmem:[#allocation2 + $0x8] sm:$0xff]
        %v288 = vld [vmem:[#allocation2 + $0x10] sm:$0x1]
        %v289 = vld [vmem:[#allocation2 + $0x18] sm:$0x1]
        %v290 = vld [vmem:[%s2] sm:$0xf]
        %291 = vrot.lane.b32.xlu0 %v284, 17
        %v292 = vpop.permute.xlu0 %291
        %293 = vrot.lane.b32.xlu0 %v285, 17
        %v294 = vpop.permute.xlu0 %293
        %v295 = vlaneseq
        %v296 = vand.u32 %v295, 127
        %vm297 = vcmp.lt.s32.totalorder %v296, 17
        %v298 = vsel %vm297, %v292, %v294
        %v299 = vsel %vm297, %v294, %v292
        %v300 = vlaneseq
        %v301 = vshrl.u32 %v300, 7
        %v302 = vsub.s32 0, %v301
        %v303 = vrot.slane %v286, %v302
        %v304 = vlaneseq
        %v305 = vshrl.u32 %v304, 7
        %v306 = vsub.s32 0, %v305
        %v307 = vrot.slane %v287, %v306
        %v308 = vmul.f32 %v299, %v303
        %v309 = vmul.f32 %v298, %v307
        %310 = vrot.lane.b32.xlu0 %v284, 16
        %v311 = vpop.permute.xlu0 %310
        %312 = vrot.lane.b32.xlu0 %v285, 16
        %v313 = vpop.permute.xlu0 %312
        %vm314 = vcmp.lt.s32.totalorder %v296, 16
        %v315 = vsel %vm314, %v311, %v313
        %v316 = vsel %vm314, %v313, %v311
        %v317 = vlaneseq
        %v318 = vshrl.u32 %v317, 7
        %v319 = vsub.s32 1, %v318
        %v320 = vrot.slane %v286, %v319
        %v321 = vlaneseq
        %v322 = vshrl.u32 %v321, 7
        %v323 = vsub.s32 1, %v322
        %v324 = vrot.slane %v287, %v323
        %v325 = vmul.f32 %v316, %v320
        %v326 = vmul.f32 %v315, %v324
        %327 = vrot.lane.b32.xlu0 %v284, 15
        %v328 = vpop.permute.xlu0 %327
        %329 = vrot.lane.b32.xlu0 %v285, 15
        %v330 = vpop.permute.xlu0 %329
        %vm331 = vcmp.lt.s32.totalorder %v296, 15
        %v332 = vsel %vm331, %v328, %v330
        %v333 = vsel %vm331, %v330, %v328
        %v334 = vlaneseq
        %v335 = vshrl.u32 %v334, 7
        %v336 = vsub.s32 2, %v335
        %v337 = vrot.slane %v286, %v336
        %v338 = vlaneseq
        %v339 = vshrl.u32 %v338, 7
        %v340 = vsub.s32 2, %v339
        %v341 = vrot.slane %v287, %v340
        %v342 = vmul.f32 %v333, %v337
        %v343 = vmul.f32 %v332, %v341
        %344 = vrot.lane.b32.xlu0 %v284, 1
        %v345 = vpop.permute.xlu0 %344
        %346 = vrot.lane.b32.xlu0 %v285, 1
        %v347 = vpop.permute.xlu0 %346
        %vm348 = vcmp.lt.s32.totalorder %v296, 1
        %v349 = vsel %vm348, %v345, %v347
        %v350 = vsel %vm348, %v347, %v345
        %v351 = vlaneseq
        %v352 = vshrl.u32 %v351, 7
        %v353 = vsub.s32 3, %v352
        %v354 = vrot.slane %v286, %v353
        %v355 = vlaneseq
        %v356 = vshrl.u32 %v355, 7
        %v357 = vsub.s32 3, %v356
        %v358 = vrot.slane %v287, %v357
        %v359 = vmul.f32 %v350, %v354
        %v360 = vmul.f32 %v349, %v358
        %361 = vrot.lane.b32.xlu0 %v284, 127
        %v362 = vpop.permute.xlu0 %361
        %363 = vrot.lane.b32.xlu0 %v285, 127
        %v364 = vpop.permute.xlu0 %363
        %vm365 = vcmp.lt.s32.totalorder %v296, 127
        %v366 = vsel %vm365, %v362, %v364
        %v367 = vsel %vm365, %v364, %v362
        %v368 = vlaneseq
        %v369 = vshrl.u32 %v368, 7
        %v370 = vsub.s32 5, %v369
        %v371 = vrot.slane %v286, %v370
        %v372 = vlaneseq
        %v373 = vshrl.u32 %v372, 7
        %v374 = vsub.s32 5, %v373
        %v375 = vrot.slane %v287, %v374
        %v376 = vmul.f32 %v366, %v371
        %v377 = vmul.f32 %v367, %v375
        %378 = vrot.lane.b32.xlu0 %v284, 113
        %v379 = vpop.permute.xlu0 %378
        %380 = vrot.lane.b32.xlu0 %v285, 113
        %v381 = vpop.permute.xlu0 %380
        %vm382 = vcmp.lt.s32.totalorder %v296, 113
        %v383 = vsel %vm382, %v379, %v381
        %v384 = vsel %vm382, %v381, %v379
        %v385 = vlaneseq
        %v386 = vshrl.u32 %v385, 7
        %v387 = vsub.s32 6, %v386
        %v388 = vrot.slane %v286, %v387
        %v389 = vlaneseq
        %v390 = vshrl.u32 %v389, 7
        %v391 = vsub.s32 6, %v390
        %v392 = vrot.slane %v287, %v391
        %v393 = vmul.f32 %v383, %v388
        %v394 = vmul.f32 %v384, %v392
        %395 = vrot.lane.b32.xlu0 %v284, 112
        %v396 = vpop.permute.xlu0 %395
        %397 = vrot.lane.b32.xlu0 %v285, 112
        %v398 = vpop.permute.xlu0 %397
        %vm399 = vcmp.lt.s32.totalorder %v296, 112
        %v400 = vsel %vm399, %v396, %v398
        %v401 = vsel %vm399, %v398, %v396
        %v402 = vlaneseq
        %v403 = vshrl.u32 %v402, 7
        %v404 = vsub.s32 7, %v403
        %v405 = vrot.slane %v286, %v404
        %v406 = vlaneseq
        %v407 = vshrl.u32 %v406, 7
        %v408 = vsub.s32 7, %v407
        %v409 = vrot.slane %v287, %v408
        %v410 = vmul.f32 %v400, %v405
        %v411 = vmul.f32 %v401, %v409
        %412 = vrot.lane.b32.xlu0 %v284, 111
        %v413 = vpop.permute.xlu0 %412
        %414 = vrot.lane.b32.xlu0 %v285, 111
        %v415 = vpop.permute.xlu0 %414
        %vm416 = vcmp.lt.s32.totalorder %v296, 111
        %v417 = vsel %vm416, %v413, %v415
        %v418 = vsel %vm416, %v415, %v413
        %v419 = vlaneseq
        %v420 = vshrl.u32 %v419, 7
        %v421 = vsub.s32 0, %v420
        %v422 = vrot.slane %v288, %v421
        %v423 = vlaneseq
        %v424 = vshrl.u32 %v423, 7
        %v425 = vsub.s32 0, %v424
        %v426 = vrot.slane %v289, %v425
        %v427 = vmul.f32 %v417, %v422
        %v428 = vmul.f32 %v418, %v426
        %v429 = vpack.c.bf16 %v325, %v308
        %v430 = vpack.c.bf16 %v326, %v309
        %v431 = vpack.c.bf16 %v359, %v342
        %v432 = vpack.c.bf16 %v360, %v343
        %v433 = vpack.c.bf16 %v376, %v284
        %v434 = vpack.c.bf16 %v377, %v285
        %v435 = vpack.c.bf16 %v410, %v393
        %v436 = vpack.c.bf16 %v411, %v394
        %v437 = vpack.c.bf16 %v427, %v427
        %v438 = vpack.c.bf16 %v428, %v428
        %v439 = vld [vmem:[%s3] sm:$0xff]
        %441 = vset.pattern.permute.xlu0 0
        %442 = vperm.xlu0 %441, %v439
        %v443 = vpop.permute.xlu0 %442
        %vm445 = vcmask 588800
        %v447 = vsel %vm445, %v290, 0
        %vm449 = vcmask 1043456
        %v451 = vsel %vm449, %v437, 0
        %v454 = vsel %vm449, %v438, 0
        %456 = vmatprep.subr.bf16.mxu0 %v430
        %457 = vmatpush1.bf16.msra.mxu0 %v429
        %458 = vmatprep.subr.bf16.mxu0 %v432
        %459 = vmatpush1.bf16.msra.mxu0 %v431
        %460 = vmatprep.subr.bf16.mxu0 %v434
        %461 = vmatpush1.bf16.msra.mxu0 %v433
        %462 = vmatprep.subr.bf16.mxu0 %v436
        %463 = vmatpush1.bf16.msra.mxu0 %v435
        %464 = vmatprep.subr.bf16.mxu0 %v454
        %465 = vmatpush1.bf16.msra.mxu0 %v451
        %466 = vmatprep.subr.bf16.mxu0 0
        %467 = vmatpush1.bf16.msra.mxu0 0
        %468 = vmatprep.subr.bf16.mxu0 0
        %469 = vmatpush1.bf16.msra.mxu0 0
        %470 = vmatprep.subr.bf16.mxu0 0
        %471 = vmatpush1.bf16.msra.mxu0 0
        %472 = vmatprep.subr.bf16.mxu0 0
        %473 = vmatpush1.bf16.msra.mxu0 0
        %474 = vmatprep.subr.bf16.mxu0 0
        %475 = vmatpush1.bf16.msra.mxu0 0
        %476 = vmatprep.subr.bf16.mxu0 0
        %477 = vmatpush1.bf16.msra.mxu0 0
        %478 = vmatprep.subr.bf16.mxu0 0
        %479 = vmatpush1.bf16.msra.mxu0 0
        %480 = vmatprep.subr.bf16.mxu0 0
        %481 = vmatpush1.bf16.msra.mxu0 0
        %482 = vmatprep.subr.bf16.mxu0 0
        %483 = vmatpush1.bf16.msra.mxu0 0
        %484 = vmatprep.subr.bf16.mxu0 0
        %485 = vmatpush1.bf16.msra.mxu0 0
        %486 = vmatprep.subr.bf16.mxu0 0
        %487 = vmatpush1.bf16.msra.mxu0 0
        %488 = vmatprep.mubr.bf16.mxu0 0
        %489 = vmatmul.mubr.bf16.gmra.mrb[0].mxu0 %v447
        %v490 = vpop.f32.mrb[0].mxu0
        %v491 = vadd.f32 %v443, %v490
        %v492 = vpop.f32.mrb[0].mxu0
        %v493 = vadd.f32 %v443, %v492
        %v494 = vpop.f32.mrb[0].mxu0
        %v495 = vpop.f32.mrb[0].mxu0
        %496 = vdwg.mxu0
        %vm497 = vcmp.gt.f32.partialorder %v491, 0.0
        %vm498 = vcmp.gt.f32.partialorder %v493, 0.0
        %v499 = vmul.f32 %v491, 0.1
        %v500 = vmul.f32 %v493, 0.1
        %v501 = vsel %vm497, %v491, %v499
        %v502 = vsel %vm498, %v493, %v500
        %v503 = vld [vmem:[%s4] sm:$0xf]
        %504 = vrot.lane.b32.xlu0 %v501, 17
        %v505 = vpop.permute.xlu0 %504
        %506 = vrot.lane.b32.xlu0 %v502, 17
        %v507 = vpop.permute.xlu0 %506
        %v508 = vsel %vm297, %v505, %v507
        %v509 = vsel %vm297, %v507, %v505
        %v510 = vmul.f32 %v509, %v303
        %v511 = vmul.f32 %v508, %v307
        %512 = vrot.lane.b32.xlu0 %v501, 16
        %v513 = vpop.permute.xlu0 %512
        %514 = vrot.lane.b32.xlu0 %v502, 16
        %v515 = vpop.permute.xlu0 %514
        %v516 = vsel %vm314, %v513, %v515
        %v517 = vsel %vm314, %v515, %v513
        %v518 = vmul.f32 %v517, %v320
        %v519 = vmul.f32 %v516, %v324
        %520 = vrot.lane.b32.xlu0 %v501, 15
        %v521 = vpop.permute.xlu0 %520
        %522 = vrot.lane.b32.xlu0 %v502, 15
        %v523 = vpop.permute.xlu0 %522
        %v524 = vsel %vm331, %v521, %v523
        %v525 = vsel %vm331, %v523, %v521
        %v526 = vmul.f32 %v525, %v337
        %v527 = vmul.f32 %v524, %v341
        %528 = vrot.lane.b32.xlu0 %v501, 1
        %v529 = vpop.permute.xlu0 %528
        %530 = vrot.lane.b32.xlu0 %v502, 1
        %v531 = vpop.permute.xlu0 %530
        %v532 = vsel %vm348, %v529, %v531
        %v533 = vsel %vm348, %v531, %v529
        %v534 = vmul.f32 %v533, %v354
        %v535 = vmul.f32 %v532, %v358
        %536 = vrot.lane.b32.xlu0 %v501, 127
        %v537 = vpop.permute.xlu0 %536
        %538 = vrot.lane.b32.xlu0 %v502, 127
        %v539 = vpop.permute.xlu0 %538
        %v540 = vsel %vm365, %v537, %v539
        %v541 = vsel %vm365, %v539, %v537
        %v542 = vmul.f32 %v540, %v371
        %v543 = vmul.f32 %v541, %v375
        %544 = vrot.lane.b32.xlu0 %v501, 113
        %v545 = vpop.permute.xlu0 %544
        %546 = vrot.lane.b32.xlu0 %v502, 113
        %v547 = vpop.permute.xlu0 %546
        %v548 = vsel %vm382, %v545, %v547
        %v549 = vsel %vm382, %v547, %v545
        %v550 = vmul.f32 %v548, %v388
        %v551 = vmul.f32 %v549, %v392
        %552 = vrot.lane.b32.xlu0 %v501, 112
        %v553 = vpop.permute.xlu0 %552
        %554 = vrot.lane.b32.xlu0 %v502, 112
        %v555 = vpop.permute.xlu0 %554
        %v556 = vsel %vm399, %v553, %v555
        %v557 = vsel %vm399, %v555, %v553
        %v558 = vmul.f32 %v556, %v405
        %v559 = vmul.f32 %v557, %v409
        %560 = vrot.lane.b32.xlu0 %v501, 111
        %v561 = vpop.permute.xlu0 %560
        %562 = vrot.lane.b32.xlu0 %v502, 111
        %v563 = vpop.permute.xlu0 %562
        %v564 = vsel %vm416, %v561, %v563
        %v565 = vsel %vm416, %v563, %v561
        %v566 = vmul.f32 %v564, %v422
        %v567 = vmul.f32 %v565, %v426
        %v568 = vpack.c.bf16 %v518, %v510
        %v569 = vpack.c.bf16 %v519, %v511
        %v570 = vpack.c.bf16 %v534, %v526
        %v571 = vpack.c.bf16 %v535, %v527
        %v572 = vpack.c.bf16 %v542, %v501
        %v573 = vpack.c.bf16 %v543, %v502
        %v574 = vpack.c.bf16 %v558, %v550
        %v575 = vpack.c.bf16 %v559, %v551
        %v576 = vpack.c.bf16 %v566, %v566
        %v577 = vpack.c.bf16 %v567, %v567
        %v578 = vld [vmem:[%s5] sm:$0xff]
        %580 = vset.pattern.permute.xlu0 0
        %581 = vperm.xlu0 %580, %v578
        %v582 = vpop.permute.xlu0 %581
        %v585 = vsel %vm445, %v503, 0
        %v588 = vsel %vm449, %v576, 0
        %v591 = vsel %vm449, %v577, 0
        %593 = vmatprep.subr.bf16.mxu0 %v569
        %594 = vmatpush1.bf16.msra.mxu0 %v568
        %595 = vmatprep.subr.bf16.mxu0 %v571
        %596 = vmatpush1.bf16.msra.mxu0 %v570
        %597 = vmatprep.subr.bf16.mxu0 %v573
        %598 = vmatpush1.bf16.msra.mxu0 %v572
        %599 = vmatprep.subr.bf16.mxu0 %v575
        %600 = vmatpush1.bf16.msra.mxu0 %v574
        %601 = vmatprep.subr.bf16.mxu0 %v591
        %602 = vmatpush1.bf16.msra.mxu0 %v588
        %603 = vmatprep.subr.bf16.mxu0 0
        %604 = vmatpush1.bf16.msra.mxu0 0
        %605 = vmatprep.subr.bf16.mxu0 0
        %606 = vmatpush1.bf16.msra.mxu0 0
        %607 = vmatprep.subr.bf16.mxu0 0
        %608 = vmatpush1.bf16.msra.mxu0 0
        %609 = vmatprep.subr.bf16.mxu0 0
        %610 = vmatpush1.bf16.msra.mxu0 0
        %611 = vmatprep.subr.bf16.mxu0 0
        %612 = vmatpush1.bf16.msra.mxu0 0
        %613 = vmatprep.subr.bf16.mxu0 0
        %614 = vmatpush1.bf16.msra.mxu0 0
        %615 = vmatprep.subr.bf16.mxu0 0
        %616 = vmatpush1.bf16.msra.mxu0 0
        %617 = vmatprep.subr.bf16.mxu0 0
        %618 = vmatpush1.bf16.msra.mxu0 0
        %619 = vmatprep.subr.bf16.mxu0 0
        %620 = vmatpush1.bf16.msra.mxu0 0
        %621 = vmatprep.subr.bf16.mxu0 0
        %622 = vmatpush1.bf16.msra.mxu0 0
        %623 = vmatprep.subr.bf16.mxu0 0
        %624 = vmatpush1.bf16.msra.mxu0 0
        %625 = vmatprep.mubr.bf16.mxu0 0
        %626 = vmatmul.mubr.bf16.gmra.mrb[0].mxu0 %v585
        %v627 = vpop.f32.mrb[0].mxu0
        %v628 = vadd.f32 %v582, %v627
        %v629 = vpop.f32.mrb[0].mxu0
        %v630 = vadd.f32 %v582, %v629
        %v631 = vpop.f32.mrb[0].mxu0
        %v632 = vpop.f32.mrb[0].mxu0
        %633 = vdwg.mxu0
        %vm634 = vcmp.gt.f32.partialorder %v628, 0.0
        %vm635 = vcmp.gt.f32.partialorder %v630, 0.0
        %v636 = vmul.f32 %v628, 0.1
        %v637 = vmul.f32 %v630, 0.1
        %v638 = vsel %vm634, %v628, %v636
        %v639 = vsel %vm635, %v630, %v637
        %v640 = vadd.f32 %v284, %v638
        %v641 = vadd.f32 %v285, %v639
        %vm642 = vcmp.gt.f32.partialorder %v640, 0.0
        %vm643 = vcmp.gt.f32.partialorder %v641, 0.0
        %v644 = vmul.f32 %v640, 0.1
        %v645 = vmul.f32 %v641, 0.1
        %v646 = vsel %vm642, %v640, %v644
        %v647 = vsel %vm643, %v641, %v645
        %648 = vst [vmem:[%s282] sm:$0xff] %v646
        %649 = vst [vmem:[%s282 + $0x8] sm:$0xff] %v647
        %s650 = sand.u32 %s163, 1
        %s651 = scalar_lea.sflag [#allocation4], %s650
        %s652 = sand.u32 %s163, 1
        %s653 = smul.addr %s652, 16
        %s654 = scalar_lea.vmem [#allocation7], %s653
        // Predicated region
        $region53: #{tpu_custom_call.1} parent=43 // pred_check
          %p655 = pneg %p173
        $region54: #{tpu_custom_call.1} parent=43 // pred_check_branch
          %657 = sbr.rel (%p655) target = $region56
        $region55: #{tpu_custom_call.1} parent=43 // pred_region
          %s659 = ssub.s32 256, 256
          %660 = vsyncadd %s651, %s659
          %s661 = smul.addr %s24, 2
          %s662 = smul.addr %s661, 128
          %s663 = scalar_lea.hbm %s6, %s662
          %s665 = sshll.u32 %s654, 4
          %s666 = int_to_ptr.vmem [resolvable:$true] %s665
          %668 = dma.vmem_to_hbm [thread:$0]  %s666, 256, %s663, %s651
        $region56: #{tpu_custom_call.1} parent=43 // pred_fallthru
          _
      $region44: #{tpu_custom_call.1} parent=5 // pred_fallthru
        _
      %p669 = scmp.le.s32.totalorder 2, %s19
      // Predicated region
      $region57: #{tpu_custom_call.1} parent=5 // pred_check
        %p670 = pneg %p669
      $region58: #{tpu_custom_call.1} parent=5 // pred_check_branch
        %672 = sbr.rel (%p670) target = $region60
      $region59: #{tpu_custom_call.1} parent=5 // pred_region
        %s673 = ssub.s32 %s19, 2
        // Predicated region
        $region61: #{tpu_custom_call.1} parent=59 // pred_check
          %p674 = pneg %p179
        $region62: #{tpu_custom_call.1} parent=59 // pred_check_branch
          %676 = sbr.rel (%p674) target = $region64
        $region63: #{tpu_custom_call.1} parent=59 // pred_region
          %s677 = sand.u32 %s164, 1
          %s678 = scalar_lea.sflag [#allocation4], %s677
          %s679 = sand.u32 %s164, 1
          %s680 = smul.addr %s679, 16
          %s681 = scalar_lea.vmem [#allocation7], %s680
          %682 = dma.done %s678, 256
        $region64: #{tpu_custom_call.1} parent=59 // pred_fallthru
          _
      $region60: #{tpu_custom_call.1} parent=5 // pred_fallthru
        _
    $region6: #{tpu_custom_call.1} parent=1 // loop_footer
      %s23 = sadd.s32 1, %s19
    $region7: #{tpu_custom_call.1} parent=1 // loop_footer_branch
      %18 = sbr.rel target = $region3
    $region8: #{tpu_custom_call.1} parent=1 // loop_exit
      _
    %683 = vsyncpa [#allocation3], 1
    %s684 = scalar_lea.sflag [#allocation3], 1
    %685 = vsyncpa %s684, 1
    %686 = vsyncpa [#allocation6], 1
    %s687 = scalar_lea.sflag [#allocation6], 1
    %688 = vsyncpa %s687, 1
    %689 = vsyncpa [#allocation4], 1
    %s690 = scalar_lea.sflag [#allocation4], 1
    %691 = vsyncpa %s690, 1

</llo_original>
